<compile_context>
chip_gen: v5e
topology: v5e:2x2
jax: 0.10.0
libtpu: 0.0.40
codegen_flags: <defaults>
</compile_context>

<pallas_src>
import math
import numpy as np
import jax
import jax.numpy as jnp
from jax import lax
from jax.experimental import pallas as pl
from jax.experimental.pallas import tpu as pltpu


# ---------------------------------------------------------------------------
# Tiled projection kernel:  out = x @ W^T + b   (W kept in PyTorch [out, in] layout)
# ---------------------------------------------------------------------------
def _pick_tile(dim, target, align):
    """Largest block <= target that divides dim and is a multiple of `align`,
    falling back to the full dimension (always a legal block)."""
    if dim <= target:
        return dim
    t = (target // align) * align
    while t >= align:
        if dim % t == 0:
            return t
        t -= align
    return dim


def matmul_bias_kernel(x_ref, w_ref, b_ref, o_ref, acc_ref):
    # x: (tm, tk)  w: (tn, tk)  b: (1, tn)  o: (tm, tn)  acc: (tm, tn) f32
    @pl.when(pl.program_id(2) == 0)
    def _init():
        acc_ref[...] = jnp.zeros_like(acc_ref)

    acc_ref[...] += lax.dot_general(
        x_ref[...].astype(jnp.bfloat16),          # bf16 in, f32 accumulate: native MXU rate
        w_ref[...].astype(jnp.bfloat16),
        dimension_numbers=(((1,), (1,)), ((), ())),   # x @ W^T without materializing W^T
        preferred_element_type=jnp.float32)

    @pl.when(pl.program_id(2) == pl.num_programs(2) - 1)
    def _finalize():
        o_ref[...] = (acc_ref[...] + b_ref[...]).astype(o_ref.dtype)


def matmul_bias(x, w, b, *, tm=256, tn=256, tk=512):
    # x: [M, K], w: [N, K] (PyTorch Linear layout), b: [N]  ->  [M, N]
    M, K = x.shape
    N, K2 = w.shape
    assert K == K2
    tm = _pick_tile(M, tm, 8)
    tn = _pick_tile(N, tn, 128)
    tk = _pick_tile(K, tk, 128)
    grid = (M // tm, N // tn, K // tk)
    return pl.pallas_call(
        matmul_bias_kernel,
        out_shape=jax.ShapeDtypeStruct((M, N), x.dtype),
        grid=grid,
        in_specs=[
            pl.BlockSpec((tm, tk), lambda i, j, k: (i, k)),
            pl.BlockSpec((tn, tk), lambda i, j, k: (j, k)),
            pl.BlockSpec((1, tn), lambda i, j, k: (0, j)),
        ],
        out_specs=pl.BlockSpec((tm, tn), lambda i, j, k: (i, j)),
        scratch_shapes=[pltpu.VMEM((tm, tn), jnp.float32)],
        compiler_params=pltpu.CompilerParams(
            dimension_semantics=("parallel", "parallel", "arbitrary")),
    )(x, w, b.reshape(1, N))


# ---------------------------------------------------------------------------
# Fused RoPE + causal attention kernel (all heads of one batch element per step)
# ---------------------------------------------------------------------------
def rope_causal_attention_kernel(qkv_ref, cos_ref, sin_ref, o_ref):
    # qkv: (T, 3, H, D) for the current batch element; cos/sin: (T, D); o: (T, H, D)
    T, _, H, D = qkv_ref.shape
    scale = 1.0 / math.sqrt(D)

    cosp = cos_ref[...][:, None, :]            # (T, 1, D) f32
    sinp = sin_ref[...][:, None, :]

    # Interleaved rotate_half via XLU rolls + parity select (no MXU, no DxD operand):
    #   out[..., 2i] = -x[..., 2i+1],  out[..., 2i+1] = x[..., 2i]
    even = (lax.broadcasted_iota(jnp.int32, (T, H, D), 2) % 2) == 0

    def rope(x):
        x_next = pltpu.roll(x, D - 1, 2)       # x_next[..., j] = x[..., (j+1) % D]
        x_prev = pltpu.roll(x, 1, 2)           # x_prev[..., j] = x[..., (j-1) % D]
        rot = jnp.where(even, -x_next, x_prev)
        return x * cosp + rot * sinp

    q = rope(qkv_ref[:, 0].astype(jnp.float32)) * scale    # fold 1/sqrt(D) into q
    k = rope(qkv_ref[:, 1].astype(jnp.float32))
    v = qkv_ref[:, 2]

    # causal mask, hoisted out of the head loop (is_causal=True in the reference)
    row = lax.broadcasted_iota(jnp.int32, (T, T), 0)
    col = lax.broadcasted_iota(jnp.int32, (T, T), 1)
    causal = row >= col

    # TODO(synk): full-S softmax per (batch, all-heads) block; switch to flash-style
    # tq x tk tiling with online softmax for long sequences (v7x 64 MiB VMEM budget).
    for h in range(H):                         # H is small and static -> unrolled
        q_h = q[:, h, :].astype(jnp.bfloat16)
        k_h = k[:, h, :].astype(jnp.bfloat16)
        v_h = v[:, h, :].astype(jnp.bfloat16)
        s = lax.dot_general(q_h, k_h,
                            dimension_numbers=(((1,), (1,)), ((), ())),  # q @ k^T, no .T
                            preferred_element_type=jnp.float32)
        s = jnp.where(causal, s, -jnp.inf)
        m = jnp.max(s, axis=-1, keepdims=True)
        p = jnp.exp(s - m)                                  # softmax numerics in f32
        l = jnp.sum(p, axis=-1, keepdims=True)
        o_h = lax.dot_general(p.astype(jnp.bfloat16), v_h,
                              dimension_numbers=(((1,), (0,)), ((), ())),
                              preferred_element_type=jnp.float32)
        o_h = o_h * pl.reciprocal(l, approx=True)           # normalize after PV (EUP)
        o_ref[:, h, :] = o_h.astype(o_ref.dtype)


def rope_causal_attention(proj5, cos_pos, sin_pos):
    # proj5: [T, B, 3, H, D]; cos/sin: [T, D]  ->  [T, B, H, D]
    T, B, _, H, D = proj5.shape
    return pl.pallas_call(
        rope_causal_attention_kernel,
        out_shape=jax.ShapeDtypeStruct((T, B, H, D), proj5.dtype),
        grid=(B,),
        in_specs=[
            pl.BlockSpec((T, None, 3, H, D), lambda b: (0, b, 0, 0, 0)),
            pl.BlockSpec((T, D), lambda b: (0, 0)),
            pl.BlockSpec((T, D), lambda b: (0, 0)),
        ],
        out_specs=pl.BlockSpec((T, None, H, D), lambda b: (0, b, 0, 0)),
        compiler_params=pltpu.CompilerParams(dimension_semantics=("parallel",)),
    )(proj5, cos_pos, sin_pos)


# ---------------------------------------------------------------------------
# Module forward (Pallas-backed)
# ---------------------------------------------------------------------------
def mha_forward(query, sin, cos, in_proj_weight, in_proj_bias,
                out_proj_weight, out_proj_bias, num_heads):
    T, B, E = query.shape
    H = num_heads
    D = E // H

    # in_proj: [T*B, E] @ W_in^T + b_in  (tiled Pallas matmul, weight untransposed)
    proj = matmul_bias(query.reshape(T * B, E), in_proj_weight, in_proj_bias)  # [T*B, 3E]
    proj5 = proj.reshape(T, B, 3, H, D)        # free row-major view, no transpose

    # interleave-duplicated RoPE tables: [t, 2i] = [t, 2i+1] = table[t, i]
    sin_pos = jnp.stack([sin[:T], sin[:T]], axis=-1).reshape(T, D)
    cos_pos = jnp.stack([cos[:T], cos[:T]], axis=-1).reshape(T, D)

    attn = rope_causal_attention(proj5, cos_pos, sin_pos)     # [T, B, H, D]
    attn2d = attn.reshape(T * B, E)            # == permute(2,0,1,3).view(T*B, E), free

    out = matmul_bias(attn2d, out_proj_weight, out_proj_bias)  # [T*B, E]
    return out.reshape(T, B, E)


# ---------------------------------------------------------------------------
# Pure-JAX reference for validation
# ---------------------------------------------------------------------------
def mha_reference(query, sin, cos, in_w, in_b, out_w, out_b, num_heads):
    T, B, E = query.shape
    H = num_heads
    D = E // H
    proj = query @ in_w.T + in_b
    q, k, v = jnp.split(proj, 3, axis=-1)

    def to_bhtd(x):
        return x.reshape(T, B, H, D).transpose(1, 2, 0, 3)
    q, k, v = to_bhtd(q), to_bhtd(k), to_bhtd(v)

    sin_pos = jnp.stack([sin[:T], sin[:T]], axis=-1).reshape(T, D)
    cos_pos = jnp.stack([cos[:T], cos[:T]], axis=-1).reshape(T, D)

    def rotate_half(x):
        xr = x.reshape(*x.shape[:-1], D // 2, 2)
        xr = jnp.stack([-xr[..., 1], xr[..., 0]], axis=-1)
        return xr.reshape(*x.shape)

    q = q * cos_pos + rotate_half(q) * sin_pos
    k = k * cos_pos + rotate_half(k) * sin_pos

    s = jnp.einsum('bhtd,bhsd->bhts', q, k) / math.sqrt(D)
    mask = jnp.tril(jnp.ones((T, T), bool))
    s = jnp.where(mask, s, -jnp.inf)
    p = jax.nn.softmax(s, axis=-1)
    o = jnp.einsum('bhts,bhsd->bhtd', p, v)
    o = o.transpose(2, 0, 1, 3).reshape(T * B, E)
    out = o @ out_w.T + out_b
    return out.reshape(T, B, E)


# ---------------------------------------------------------------------------
if __name__ == "__main__":
    # Small shapes consistent with the module: seq=8, batch=2, embed=32, heads=4
    T, B, E, H = 8, 2, 32, 4
    D = E // H

    key = jax.random.PRNGKey(0)
    k1, k2, k3 = jax.random.split(key, 3)

    # Parameters (deterministic, synthetic):
    #   in_proj_weight: xavier_uniform on (3E, E); biases zero;
    #   out_proj.weight: default Linear-style init ~ U(-1/sqrt(E), 1/sqrt(E)).
    xav = math.sqrt(6.0 / (3 * E + E))
    in_proj_weight = jax.random.uniform(k1, (3 * E, E), jnp.float32, -xav, xav)
    in_proj_bias = jnp.zeros((3 * E,), jnp.float32)
    lin = 1.0 / math.sqrt(E)
    out_proj_weight = jax.random.uniform(k2, (E, E), jnp.float32, -lin, lin)
    out_proj_bias = jnp.zeros((E,), jnp.float32)

    # Inputs
    query = jax.random.normal(k3, (T, B, E), jnp.float32)  # [tgt_len, bsz, embed_dim]
    # RoPE tables of shape [src_len, head_dim // 2]
    pos = np.arange(T, dtype=np.float32)[:, None]
    inv_freq = 1.0 / (10000.0 ** (np.arange(0, D, 2, dtype=np.float32) / D))[None, :]
    ang = pos * inv_freq                                    # [T, D//2]
    sin = jnp.asarray(np.sin(ang))
    cos = jnp.asarray(np.cos(ang))

    out = mha_forward(query, sin, cos, in_proj_weight, in_proj_bias,
                      out_proj_weight, out_proj_bias, H)
    out = jax.block_until_ready(out)

    ref = mha_reference(query, sin, cos, in_proj_weight, in_proj_bias,
                        out_proj_weight, out_proj_bias, H)
    # bf16 MXU inputs + approx reciprocal -> looser tolerance than pure f32.
    np.testing.assert_allclose(np.asarray(out), np.asarray(ref),
                               rtol=3e-2, atol=3e-2)
    print("KERNEL_OK")
</pallas_src>

<mosaic_0001>
module attributes {stable_mosaic.version = 11 : i64} {
  func.func @matmul_bias_kernel(%arg0: i32, %arg1: i32, %arg2: i32, %arg3: memref<16x32xf32, #tpu.memory_space<vmem>>, %arg4: memref<96x32xf32, #tpu.memory_space<vmem>>, %arg5: memref<1x96xf32, #tpu.memory_space<vmem>>, %arg6: memref<16x96xf32, #tpu.memory_space<vmem>>, %arg7: memref<16x96xf32, #tpu.memory_space<vmem>>) attributes {dimension_semantics = [#tpu.dimension_semantics<parallel>, #tpu.dimension_semantics<parallel>, #tpu.dimension_semantics<arbitrary>], iteration_bounds = array<i64: 1, 1, 1>, scalar_prefetch = 0 : i64, scratch_operands = 1 : i64, tpu.core_type = #tpu.core_type<tc>, window_params = [{transform_indices = @transform_0, window_bounds = array<i64: 16, 32>}, {transform_indices = @transform_1, window_bounds = array<i64: 96, 32>}, {transform_indices = @transform_2, window_bounds = array<i64: 1, 96>}, {transform_indices = @transform_3, window_bounds = array<i64: 16, 96>}]} {
    %c0_i32 = arith.constant 0 : i32
    %0 = arith.cmpi eq, %arg2, %c0_i32 : i32
    %1 = arith.extui %0 : i1 to i32
    %c0_i32_0 = arith.constant 0 : i32
    %2 = arith.cmpi ne, %1, %c0_i32_0 : i32
    scf.if %2 {
      %cst_10 = arith.constant 0.000000e+00 : f32
      %14 = vector.broadcast %cst_10 : f32 to vector<16x96xf32>
      %c0_11 = arith.constant 0 : index
      %c0_12 = arith.constant 0 : index
      %15 = vector.load %arg7[%c0_11, %c0_12] : memref<16x96xf32, #tpu.memory_space<vmem>>, vector<16x96xf32>
      tpu.vector_store %arg7[%c0_11, %c0_12], %14 {strides = array<i32>} : memref<16x96xf32, #tpu.memory_space<vmem>>, vector<16x96xf32>,
    } else {
    }
    %c0 = arith.constant 0 : index
    %c0_1 = arith.constant 0 : index
    %3 = vector.load %arg7[%c0, %c0_1] : memref<16x96xf32, #tpu.memory_space<vmem>>, vector<16x96xf32>
    %c0_2 = arith.constant 0 : index
    %c0_3 = arith.constant 0 : index
    %4 = vector.load %arg3[%c0_2, %c0_3] : memref<16x32xf32, #tpu.memory_space<vmem>>, vector<16x32xf32>
    %5 = arith.truncf %4 : vector<16x32xf32> to vector<16x32xbf16>
    %c0_4 = arith.constant 0 : index
    %c0_5 = arith.constant 0 : index
    %6 = vector.load %arg4[%c0_4, %c0_5] : memref<96x32xf32, #tpu.memory_space<vmem>>, vector<96x32xf32>
    %7 = arith.truncf %6 : vector<96x32xf32> to vector<96x32xbf16>
    %cst = arith.constant dense<0.000000e+00> : vector<16x96xf32>
    %8 = tpu.matmul %5, %7, %cst {dimension_numbers = #tpu.dot_dimension_numbers<[1], [1], [0], [0], [0, 0, 1, 0], [], []>} : vector<16x32xbf16>, vector<96x32xbf16>, vector<16x96xf32> -> vector<16x96xf32>
    %9 = arith.addf %3, %8 : vector<16x96xf32>
    %c0_6 = arith.constant 0 : index
    %c0_7 = arith.constant 0 : index
    %10 = vector.load %arg7[%c0_6, %c0_7] : memref<16x96xf32, #tpu.memory_space<vmem>>, vector<16x96xf32>
    tpu.vector_store %arg7[%c0_6, %c0_7], %9 {strides = array<i32>} : memref<16x96xf32, #tpu.memory_space<vmem>>, vector<16x96xf32>,
    %c0_i32_8 = arith.constant 0 : i32
    %11 = arith.cmpi eq, %arg2, %c0_i32_8 : i32
    %12 = arith.extui %11 : i1 to i32
    %c0_i32_9 = arith.constant 0 : i32
    %13 = arith.cmpi ne, %12, %c0_i32_9 : i32
    scf.if %13 {
      %c0_10 = arith.constant 0 : index
      %c0_11 = arith.constant 0 : index
      %14 = vector.load %arg7[%c0_10, %c0_11] : memref<16x96xf32, #tpu.memory_space<vmem>>, vector<16x96xf32>
      %c0_12 = arith.constant 0 : index
      %c0_13 = arith.constant 0 : index
      %15 = vector.load %arg5[%c0_12, %c0_13] : memref<1x96xf32, #tpu.memory_space<vmem>>, vector<1x96xf32>
      %16 = vector.broadcast %15 : vector<1x96xf32> to vector<16x96xf32>
      %17 = arith.addf %14, %16 : vector<16x96xf32>
      %c0_14 = arith.constant 0 : index
      %c0_15 = arith.constant 0 : index
      %18 = vector.load %arg6[%c0_14, %c0_15] : memref<16x96xf32, #tpu.memory_space<vmem>>, vector<16x96xf32>
      tpu.vector_store %arg6[%c0_14, %c0_15], %17 {strides = array<i32>} : memref<16x96xf32, #tpu.memory_space<vmem>>, vector<16x96xf32>,
    } else {
    }
    return
  }
  func.func @transform_0(%arg0: i32, %arg1: i32, %arg2: i32) -> (i32, i32) {
    %c0_i32 = arith.constant 0 : i32
    return %arg0, %arg2 : i32, i32
  }
  func.func @transform_1(%arg0: i32, %arg1: i32, %arg2: i32) -> (i32, i32) {
    %c0_i32 = arith.constant 0 : i32
    return %arg1, %arg2 : i32, i32
  }
  func.func @transform_2(%arg0: i32, %arg1: i32, %arg2: i32) -> (i32, i32) {
    %c0_i32 = arith.constant 0 : i32
    %c0_i32_0 = arith.constant 0 : i32
    return %c0_i32, %arg1 : i32, i32
  }
  func.func @transform_3(%arg0: i32, %arg1: i32, %arg2: i32) -> (i32, i32) {
    %c0_i32 = arith.constant 0 : i32
    return %arg0, %arg1 : i32, i32
  }
}

</mosaic_0001>

<llo_original>
// kernel: tpu_custom_call.1
$region0: #{tpu_custom_call.1}
  #allocation0 [shape = 'u32[]', space=smem, size = 0x4, offset = 0x4, fixed_abs, tag = 'smem constant byte address 0x4 - core index']
  #allocation1 [shape = 'u32[72,128]{1,0:T(1,128)}', space=vmem, size = 0x9000, scoped, tag = 'internal scratch']
  #allocation2 [shape = 'f32[16,96]{1,0:T(8,128)}', space=vmem, size = 0x2000, scoped, tag = 'scratch operand']
  %s0 = inlined_call_operand.vmem [shape: f32[16,32], index: 0, kind: input, shape index: {}]
  %s1 = inlined_call_operand.vmem [shape: f32[96,32], index: 1, kind: input, shape index: {}]
  %s2 = inlined_call_operand.vmem [shape: f32[1,96], index: 2, kind: input, shape index: {}]
  %s3 = inlined_call_operand.hbm [shape: f32[16,96], index: 3, kind: output, shape index: {}]
  %s4 = sld [smem:[#allocation0]]
  $region30: #{tpu_custom_call.1} parent=0
    _
  %s6 = ssub.s32 1, %s4
  %s7 = scalar_select 0, %s6, %s4
  $region1: #{tpu_custom_call.1} parent=0
    #allocation3 [shape = 'u8[8192]{0}', space=vmem, size = 0x2000, scoped, tag = 'output window, operand 0, single buffered']
    #allocation4 [shape = 's32[1]{0}', space=sflag, size = 0x4, scoped, tag = 'scoped memory for tpu_custom_call.1']
    %8 = vsyncpa [#allocation4], 0
    // Predicated region
    $region2: #{tpu_custom_call.1} parent=1 // pred_check
      _
    $region3: #{tpu_custom_call.1} parent=1 // pred_check_branch
      %10 = sbr.rel (0) target = $region5
    $region4: #{tpu_custom_call.1} parent=1 // pred_region
      _
    $region5: #{tpu_custom_call.1} parent=1 // pred_fallthru
      _
    // Predicated region
    $region6: #{tpu_custom_call.1} parent=1 // pred_check
      _
    $region7: #{tpu_custom_call.1} parent=1 // pred_check_branch
      %12 = sbr.rel (0) target = $region9
    $region8: #{tpu_custom_call.1} parent=1 // pred_region
      _
    $region9: #{tpu_custom_call.1} parent=1 // pred_fallthru
      _
    // Predicated region
    $region10: #{tpu_custom_call.1} parent=1 // pred_check
      _
    $region11: #{tpu_custom_call.1} parent=1 // pred_check_branch
      %14 = sbr.rel (0) target = $region13
    $region12: #{tpu_custom_call.1} parent=1 // pred_region
      _
    $region13: #{tpu_custom_call.1} parent=1 // pred_fallthru
      _
    %p16 = scmp.eq.s32.totalorder 0, 0
    // Predicated region
    $region14: #{tpu_custom_call.1} parent=1 // pred_check
      %p17 = pneg %p16
    $region15: #{tpu_custom_call.1} parent=1 // pred_check_branch
      %19 = sbr.rel (%p17) target = $region17
    $region16: #{tpu_custom_call.1} parent=1 // pred_region
      %vm20 = vcmask 785408
      %21 = vst.msk [vmem:[#allocation2] sm:$0xff] %vm20, 0.0
      %22 = vst.msk [vmem:[#allocation2 + $0x8] sm:$0xff] %vm20, 0.0
    $region17: #{tpu_custom_call.1} parent=1 // pred_fallthru
      _
    %v23 = vld [vmem:[#allocation2] sm:$0xff]
    %v24 = vld [vmem:[#allocation2 + $0x8] sm:$0xff]
    %v25 = vld [vmem:[%s0] sm:$0xff]
    %v26 = vld [vmem:[%s0 + $0x8] sm:$0xff]
    %v27 = vpack.c.bf16 %v26, %v25
    %v28 = vld [vmem:[%s1] sm:$0xff]
    %v29 = vld [vmem:[%s1 + $0x8] sm:$0xff]
    %v30 = vld [vmem:[%s1 + $0x10] sm:$0xff]
    %v31 = vld [vmem:[%s1 + $0x18] sm:$0xff]
    %v32 = vld [vmem:[%s1 + $0x20] sm:$0xff]
    %v33 = vld [vmem:[%s1 + $0x28] sm:$0xff]
    %v34 = vld [vmem:[%s1 + $0x30] sm:$0xff]
    %v35 = vld [vmem:[%s1 + $0x38] sm:$0xff]
    %v36 = vld [vmem:[%s1 + $0x40] sm:$0xff]
    %v37 = vld [vmem:[%s1 + $0x48] sm:$0xff]
    %v38 = vld [vmem:[%s1 + $0x50] sm:$0xff]
    %v39 = vld [vmem:[%s1 + $0x58] sm:$0xff]
    %v40 = vpack.c.bf16 %v29, %v28
    %v41 = vpack.c.bf16 %v31, %v30
    %v42 = vpack.c.bf16 %v33, %v32
    %v43 = vpack.c.bf16 %v35, %v34
    %v44 = vpack.c.bf16 %v37, %v36
    %v45 = vpack.c.bf16 %v39, %v38
    %vm46 = vcmask 261120
    %v48 = vsel %vm46, %v27, 0
    %v51 = vsel %vm46, %v40, 0
    %v54 = vsel %vm46, %v41, 0
    %v57 = vsel %vm46, %v42, 0
    %v60 = vsel %vm46, %v43, 0
    %v63 = vsel %vm46, %v44, 0
    %v66 = vsel %vm46, %v45, 0
    %68 = vmatpush.bf16.xpose.msra.mxu0 0
    %69 = vmatpush.bf16.xpose.msra.mxu0 0
    %70 = vmatpush.bf16.xpose.msra.mxu0 %v66
    %71 = vmatpush.bf16.xpose.msra.mxu0 %v63
    %72 = vmatpush.bf16.xpose.msra.mxu0 %v60
    %73 = vmatpush.bf16.xpose.msra.mxu0 %v57
    %74 = vmatpush.bf16.xpose.msra.mxu0 %v54
    %75 = vmatpush.bf16.xpose.msra.mxu0 %v51
    %76 = vmatmul.bf16.gmra.mxu0 %v48
    %v77 = vpop.f32.mrf.mxu0
    %v78 = vadd.f32 0.0, %v77
    %v79 = vpop.f32.mrf.mxu0
    %v80 = vadd.f32 0.0, %v79
    %81 = vdwg.mxu0
    %v82 = vadd.f32 %v23, %v78
    %v83 = vadd.f32 %v24, %v80
    %vm84 = vcmask 785408
    %85 = vst.msk [vmem:[#allocation2] sm:$0xff] %vm84, %v82
    %86 = vst.msk [vmem:[#allocation2 + $0x8] sm:$0xff] %vm84, %v83
    // Predicated region
    $region18: #{tpu_custom_call.1} parent=1 // pred_check
      %p87 = pneg %p16
    $region19: #{tpu_custom_call.1} parent=1 // pred_check_branch
      %89 = sbr.rel (%p87) target = $region21
    $region20: #{tpu_custom_call.1} parent=1 // pred_region
      %v90 = vld [vmem:[#allocation2] sm:$0xff]
      %v91 = vld [vmem:[#allocation2 + $0x8] sm:$0xff]
      %v92 = vld [vmem:[%s2] sm:$0x1]
      %v94 = vperm.slane %v92, 0
      %v96 = vadd.f32 %v90, %v94
      %v97 = vadd.f32 %v91, %v94
      %98 = vst.msk [vmem:[#allocation3] sm:$0xff] %vm84, %v96
      %99 = vst.msk [vmem:[#allocation3 + $0x8] sm:$0xff] %vm84, %v97
    $region21: #{tpu_custom_call.1} parent=1 // pred_fallthru
      _
    // Predicated region
    $region22: #{tpu_custom_call.1} parent=1 // pred_check
      _
    $region23: #{tpu_custom_call.1} parent=1 // pred_check_branch
      %101 = sbr.rel (0) target = $region25
    $region24: #{tpu_custom_call.1} parent=1 // pred_region
      %103 = vsyncadd [#allocation4], 0
      %s104 = sshll.u32 [#allocation3], 4
      %s105 = int_to_ptr.vmem [resolvable:$true] %s104
      %s106 = sshll.u32 %s3, 4
      %s107 = int_to_ptr.hbm [resolvable:$true] %s106
      %112 = dma.vmem_to_hbm [thread:$0]  %s105, 256, %s107, [#allocation4], 128, 128, 8
    $region25: #{tpu_custom_call.1} parent=1 // pred_fallthru
      _
    // Predicated region
    $region26: #{tpu_custom_call.1} parent=1 // pred_check
      _
    $region27: #{tpu_custom_call.1} parent=1 // pred_check_branch
      %114 = sbr.rel (0) target = $region29
    $region28: #{tpu_custom_call.1} parent=1 // pred_region
      %116 = dma.done [#allocation4], 256
    $region29: #{tpu_custom_call.1} parent=1 // pred_fallthru
      _
    %117 = vsyncpa [#allocation4], 1

</llo_original>
